<compile_context>
chip_gen: v6e
topology: v6e:2x2x1
jax: 0.10.0
libtpu: 0.0.40
codegen_flags: <defaults>
</compile_context>

<pallas_src>
import functools
import math
import numpy as np
import jax
import jax.numpy as jnp
from jax.experimental import pallas as pl
from jax.experimental.pallas import tpu as pltpu


# ---------------------------------------------------------------------------
# Wavelet matrix construction (plain numpy glue, mirrors get_matrix exactly).
# ---------------------------------------------------------------------------
# Haar wavelet reconstruction filters (pywt.Wavelet('haar').rec_lo / rec_hi)
_HAAR_REC_LO = [1.0 / math.sqrt(2.0), 1.0 / math.sqrt(2.0)]
_HAAR_REC_HI = [1.0 / math.sqrt(2.0), -1.0 / math.sqrt(2.0)]

_LANE = 128
_SUBLANE = 8
_BT_TARGET_BYTES = 4 * 1024 * 1024      # target size of one f32 input block


def _round_up(a, m):
    return ((a + m - 1) // m) * m


def build_dwt_matrices(input_height, input_width,
                       band_low=_HAAR_REC_LO, band_high=_HAAR_REC_HI):
    band_length = len(band_low)
    assert band_length == len(band_high)
    assert band_length % 2 == 0
    band_length_half = band_length // 2

    L1 = max(input_height, input_width)
    L = L1 // 2
    matrix_h = np.zeros((L, L1 + band_length - 2), dtype=np.float64)
    matrix_g = np.zeros((L1 - L, L1 + band_length - 2), dtype=np.float64)
    end = None if band_length_half == 1 else -band_length_half + 1

    index = 0
    for i in range(L):
        for j in range(band_length):
            matrix_h[i, index + j] = band_low[j]
        index += 2
    matrix_h_0 = matrix_h[0:input_height // 2, 0:input_height + band_length - 2]
    matrix_h_1 = matrix_h[0:input_width // 2, 0:input_width + band_length - 2]

    index = 0
    for i in range(L1 - L):
        for j in range(band_length):
            matrix_g[i, index + j] = band_high[j]
        index += 2
    matrix_g_0 = matrix_g[0:input_height - input_height // 2,
                          0:input_height + band_length - 2]
    matrix_g_1 = matrix_g[0:input_width - input_width // 2,
                          0:input_width + band_length - 2]

    matrix_h_0 = matrix_h_0[:, band_length_half - 1:end]
    matrix_h_1 = matrix_h_1[:, band_length_half - 1:end]
    matrix_h_1 = np.transpose(matrix_h_1)
    matrix_g_0 = matrix_g_0[:, band_length_half - 1:end]
    matrix_g_1 = matrix_g_1[:, band_length_half - 1:end]
    matrix_g_1 = np.transpose(matrix_g_1)

    # DWT_2D_tiny only uses the low-frequency matrices in its output.
    return (np.asarray(matrix_h_0, np.float32),  # (H/2, H)
            np.asarray(matrix_h_1, np.float32),  # (W, W/2)
            np.asarray(matrix_g_0, np.float32),
            np.asarray(matrix_g_1, np.float32))


@functools.lru_cache(maxsize=None)
def _fused_ll_weight(H, W):
    """np.kron(L0.T, L1) built host-side, columns padded to a 128 multiple."""
    l0, l1, _, _ = build_dwt_matrices(H, W)
    w = np.kron(l0.T, l1).astype(np.float32)          # (H*W, (H/2)*(W/2))
    n_out = w.shape[1]
    n_pad = _round_up(max(n_out, _LANE), _LANE)
    if n_pad != n_out:
        w = np.concatenate(
            [w, np.zeros((w.shape[0], n_pad - n_out), np.float32)], axis=1)
    return w, n_out, n_pad


def _tpu_vmem_and_cores():
    """Best-effort hardware query; conservative fallback (v7x-sized VMEM)."""
    vmem = 64 * 1024 * 1024
    cores = 1
    try:
        info = pltpu.get_tpu_info()
        v = getattr(info, "vmem_capacity_bytes", None)
        if isinstance(v, int) and v > 0:
            vmem = v
        for attr in ("num_cores", "core_count", "num_tensorcores"):
            c = getattr(info, attr, None)
            if isinstance(c, int) and c > 0:
                cores = c
                break
    except Exception:
        pass
    return vmem, cores


# ---------------------------------------------------------------------------
# Kernels
# ---------------------------------------------------------------------------
def _dwt_ll_kernel_whole_k(x_ref, w_ref, o_ref):
    # Whole contraction in a single MXU matmul; lane-dense direct store to
    # the output block — no scratch accumulator, no init/finalize passes.
    o_ref[...] = jnp.dot(x_ref[...], w_ref[...],
                         preferred_element_type=jnp.float32)


def _dwt_ll_kernel_k_tiled(x_ref, w_ref, o_ref):
    # Output block is f32 and stays resident across the "arbitrary" k axis,
    # so accumulate straight into o_ref (no separate VMEM scratch).
    part = jnp.dot(x_ref[...], w_ref[...], preferred_element_type=jnp.float32)

    @pl.when(pl.program_id(1) == 0)
    def _():
        o_ref[...] = part

    @pl.when(pl.program_id(1) > 0)
    def _():
        o_ref[...] += part


# ---------------------------------------------------------------------------
# Tiling heuristics
# ---------------------------------------------------------------------------
def _choose_bt(B, tk, n_pad, budget, n_cores):
    b_ceil = _round_up(B, _SUBLANE)
    w_bytes = 2 * tk * n_pad * 4                      # double-buffered weight
    rem = max(budget - w_bytes, 2 * 1024 * 1024)
    per_row = 2 * tk * 4 + 2 * n_pad * 4              # in + out rows, 2 bufs
    bt = min(_BT_TARGET_BYTES // (4 * tk), rem // per_row)
    bt = max(bt, _SUBLANE)
    bt = min(bt, b_ceil)
    if n_cores > 1 and b_ceil > _SUBLANE:
        # Only split the parallel batch axis when there really are >=2 TCs,
        # and never drop below 256 rows (MXU fill) when the batch allows it.
        per_core = _round_up(-(-B // n_cores), _SUBLANE)
        bt = min(bt, max(per_core, min(256, b_ceil)))
    if bt >= 256:
        bt = (bt // 256) * 256                        # MXU-row-friendly tiles
    else:
        bt = _round_up(bt, _SUBLANE)
    bt = min(bt, b_ceil)
    b_pad = _round_up(B, bt)
    return bt, b_pad


def _choose_tk(K, n_pad, budget, k_tile):
    if k_tile is not None:
        tk = int(k_tile)
    elif 2 * K * n_pad * 4 <= budget // 2:
        tk = K                                        # whole K resident
    else:
        max_tk = max(_LANE, (((budget // 2) // (2 * n_pad * 4)) // _LANE) * _LANE)
        tk = None
        if K % _LANE == 0:
            t = min(max_tk, K)
            while t >= _LANE:                         # largest 128-multiple divisor
                if K % t == 0:
                    tk = t
                    break
                t -= _LANE
        if tk is None:                                # rare fallback: pad K
            tk = min(max_tk, _round_up(K, _LANE))
    kt = -(-K // tk)
    return tk, kt, tk * kt


# ---------------------------------------------------------------------------
# Public wrapper
# ---------------------------------------------------------------------------
def dwt_2d_tiny(x, *, wavename="haar", k_tile=None):
    """x: (N, C, H, W) float32 -> low-frequency LL of shape (N, C, H//2, W//2)."""
    if wavename != "haar":
        raise NotImplementedError("only 'haar' filters are built in-script")
    N, C, H, W = x.shape
    H2, W2 = H // 2, W // 2
    B, K = N * C, H * W

    w_np, n_out, n_pad = _fused_ll_weight(H, W)

    vmem_cap, n_cores = _tpu_vmem_and_cores()
    vmem_limit = int(min(int(vmem_cap * 0.75), 112 * 1024 * 1024))
    budget = max(vmem_limit - 4 * 1024 * 1024, 16 * 1024 * 1024)

    tk, kt, k_pad = _choose_tk(K, n_pad, budget, k_tile)
    bt, b_pad = _choose_bt(B, tk, n_pad, budget, n_cores)
    g = b_pad // bt

    xb = x.reshape(B, K).astype(jnp.float32)
    if b_pad != B or k_pad != K:
        # Common case: no pad at all, or only a small batch-tail pad.
        xb = jnp.pad(xb, ((0, b_pad - B), (0, k_pad - K)))

    w = jnp.asarray(w_np)
    if k_pad != K:
        w = jnp.pad(w, ((0, k_pad - K), (0, 0)))

    weight_reads = 1 if kt == 1 else g
    cost = pl.CostEstimate(
        flops=2 * b_pad * k_pad * n_pad,
        transcendentals=0,
        bytes_accessed=4 * (b_pad * k_pad + weight_reads * k_pad * n_pad
                            + b_pad * n_pad))

    if kt == 1:
        # NOTE: the constant-index weight block is fetched once and then kept
        # resident by the pipeline; single-buffering it (pl.Buffered(1)) would
        # shave a little more VMEM on v7x but is left at the default here.
        out = pl.pallas_call(
            _dwt_ll_kernel_whole_k,
            out_shape=jax.ShapeDtypeStruct((b_pad, n_pad), jnp.float32),
            grid_spec=pltpu.PrefetchScalarGridSpec(
                num_scalar_prefetch=0,
                grid=(g,),
                in_specs=[
                    pl.BlockSpec((bt, k_pad), lambda i: (i, 0)),
                    pl.BlockSpec((k_pad, n_pad), lambda i: (0, 0)),
                ],
                out_specs=pl.BlockSpec((bt, n_pad), lambda i: (i, 0)),
            ),
            compiler_params=pltpu.CompilerParams(
                dimension_semantics=("parallel",),
                vmem_limit_bytes=vmem_limit),
            cost_estimate=cost,
        )(xb, w)
    else:
        out = pl.pallas_call(
            _dwt_ll_kernel_k_tiled,
            out_shape=jax.ShapeDtypeStruct((b_pad, n_pad), jnp.float32),
            grid_spec=pltpu.PrefetchScalarGridSpec(
                num_scalar_prefetch=0,
                grid=(g, kt),
                in_specs=[
                    pl.BlockSpec((bt, tk), lambda i, k: (i, k)),
                    pl.BlockSpec((tk, n_pad), lambda i, k: (k, 0)),
                ],
                out_specs=pl.BlockSpec((bt, n_pad), lambda i, k: (i, 0)),
            ),
            compiler_params=pltpu.CompilerParams(
                dimension_semantics=("parallel", "arbitrary"),
                vmem_limit_bytes=vmem_limit),
            cost_estimate=cost,
        )(xb, w)

    return out[:B, :n_out].reshape(N, C, H2, W2)


if __name__ == "__main__":
    key0, key1, key2 = jax.random.split(jax.random.PRNGKey(0), 3)

    # --- Test 1: canonical small shape (kt == 1, Nout 64 padded to 128). ----
    N, C, H, W = 2, 4, 16, 16
    x = jax.random.normal(key0, (N, C, H, W), dtype=jnp.float32)
    out = jax.block_until_ready(dwt_2d_tiny(x))
    l0, l1, _, _ = build_dwt_matrices(H, W)
    ref = jnp.einsum('ph,nchw,wq->ncpq', jnp.asarray(l0), x, jnp.asarray(l1))
    assert out.shape == (N, C, H // 2, W // 2)
    np.testing.assert_allclose(np.asarray(out), np.asarray(ref),
                               rtol=1e-5, atol=1e-5)

    # --- Test 2: rectangular spatial dims + batch-tail padding (B=15 -> 16).
    Nb, Cb, Hb, Wb = 3, 5, 48, 32
    xb_in = jax.random.normal(key1, (Nb, Cb, Hb, Wb), dtype=jnp.float32)
    outb = jax.block_until_ready(dwt_2d_tiny(xb_in))
    l0b, l1b, _, _ = build_dwt_matrices(Hb, Wb)
    refb = jnp.einsum('ph,nchw,wq->ncpq', jnp.asarray(l0b), xb_in,
                      jnp.asarray(l1b))
    assert outb.shape == (Nb, Cb, Hb // 2, Wb // 2)
    np.testing.assert_allclose(np.asarray(outb), np.asarray(refb),
                               rtol=1e-4, atol=1e-4)

    # --- Test 3: force the K-tiled accumulate-into-output path (kt = 4). ----
    Nc, Cc, Hc, Wc = 2, 4, 32, 32
    xc = jax.random.normal(key2, (Nc, Cc, Hc, Wc), dtype=jnp.float32)
    outc = jax.block_until_ready(dwt_2d_tiny(xc, k_tile=256))
    l0c, l1c, _, _ = build_dwt_matrices(Hc, Wc)
    refc = jnp.einsum('ph,nchw,wq->ncpq', jnp.asarray(l0c), xc,
                      jnp.asarray(l1c))
    assert outc.shape == (Nc, Cc, Hc // 2, Wc // 2)
    np.testing.assert_allclose(np.asarray(outc), np.asarray(refc),
                               rtol=1e-4, atol=1e-4)

    print("KERNEL_OK")
</pallas_src>

<mosaic_0001>
module attributes {stable_mosaic.version = 11 : i64} {
  func.func @_dwt_ll_kernel_whole_k(%arg0: i32, %arg1: memref<8x256xf32, #tpu.memory_space<vmem>>, %arg2: memref<256x128xf32, #tpu.memory_space<vmem>>, %arg3: memref<8x128xf32, #tpu.memory_space<vmem>>) attributes {dimension_semantics = [#tpu.dimension_semantics<parallel>], iteration_bounds = array<i64: 1>, scalar_prefetch = 0 : i64, scratch_operands = 0 : i64, tpu.core_type = #tpu.core_type<tc>, window_params = [{transform_indices = @transform_0, window_bounds = array<i64: 8, 256>}, {pipeline_mode = #tpu.pipeline_mode<synchronous>, transform_indices = @transform_1, window_bounds = array<i64: 256, 128>}, {transform_indices = @transform_2, window_bounds = array<i64: 8, 128>}]} {
    %c0 = arith.constant 0 : index
    %c0_0 = arith.constant 0 : index
    %0 = vector.load %arg1[%c0, %c0_0] : memref<8x256xf32, #tpu.memory_space<vmem>>, vector<8x256xf32>
    %c0_1 = arith.constant 0 : index
    %c0_2 = arith.constant 0 : index
    %1 = vector.load %arg2[%c0_1, %c0_2] : memref<256x128xf32, #tpu.memory_space<vmem>>, vector<256x128xf32>
    %cst = arith.constant dense<0.000000e+00> : vector<8x128xf32>
    %2 = tpu.matmul %0, %1, %cst {dimension_numbers = #tpu.dot_dimension_numbers<[1], [0], [0], [1], [0, 0, 1, 1], [], []>} : vector<8x256xf32>, vector<256x128xf32>, vector<8x128xf32> -> vector<8x128xf32>
    %c0_3 = arith.constant 0 : index
    %c0_4 = arith.constant 0 : index
    %3 = vector.load %arg3[%c0_3, %c0_4] : memref<8x128xf32, #tpu.memory_space<vmem>>, vector<8x128xf32>
    tpu.vector_store %arg3[%c0_3, %c0_4], %2 {strides = array<i32>} : memref<8x128xf32, #tpu.memory_space<vmem>>, vector<8x128xf32>,
    return
  }
  func.func @transform_0(%arg0: i32) -> (i32, i32) {
    %c0_i32 = arith.constant 0 : i32
    %c0_i32_0 = arith.constant 0 : i32
    return %arg0, %c0_i32 : i32, i32
  }
  func.func @transform_1(%arg0: i32) -> (i32, i32) {
    %c0_i32 = arith.constant 0 : i32
    %c0_i32_0 = arith.constant 0 : i32
    %c0_i32_1 = arith.constant 0 : i32
    return %c0_i32, %c0_i32_0 : i32, i32
  }
  func.func @transform_2(%arg0: i32) -> (i32, i32) {
    %c0_i32 = arith.constant 0 : i32
    %c0_i32_0 = arith.constant 0 : i32
    return %arg0, %c0_i32 : i32, i32
  }
}

</mosaic_0001>

<llo_original>
// kernel: tpu_custom_call.1
$region0: #{tpu_custom_call.1}
  #allocation0 [shape = 'u32[]', space=smem, size = 0x4, offset = 0x4, fixed_abs, tag = 'smem constant byte address 0x4 - core index']
  #allocation1 [shape = 'u32[144,128]{1,0:T(1,128)}', space=vmem, size = 0x12000, scoped, tag = 'internal scratch']
  %s0 = inlined_call_operand.hbm [shape: f32[8,256], index: 0, kind: input, shape index: {}]
  %s1 = inlined_call_operand.hbm [shape: f32[256,128], index: 1, kind: input, shape index: {}]
  %s2 = inlined_call_operand.hbm [shape: f32[8,128], index: 2, kind: output, shape index: {}]
  %s3 = sld [smem:[#allocation0]]
  $region26: #{tpu_custom_call.1} parent=0
    _
  %s5 = ssub.s32 1, %s3
  %s6 = scalar_select 0, %s5, %s3
  $region1: #{tpu_custom_call.1} parent=0
    #allocation2 [shape = 'u8[8192]{0}', space=vmem, size = 0x2000, scoped, tag = 'input window, operand 0, single buffered']
    #allocation3 [shape = 's32[1]{0}', space=sflag, size = 0x4, scoped, tag = 'scoped memory for tpu_custom_call.1']
    #allocation4 [shape = 's32[1]{0}', space=sflag, size = 0x4, scoped, tag = 'scoped memory for tpu_custom_call.1']
    #allocation5 [shape = 'u8[131072]{0}', space=vmem, size = 0x20000, scoped, tag = 'input window, operand 1, single buffered']
    #allocation6 [shape = 's32[1]{0}', space=sflag, size = 0x4, scoped, tag = 'scoped memory for tpu_custom_call.1']
    #allocation7 [shape = 'u8[4096]{0}', space=vmem, size = 0x1000, scoped, tag = 'output window, operand 0, single buffered']
    %7 = vsyncpa [#allocation3], 0
    %8 = vsyncpa [#allocation6], 0
    %9 = vsyncpa [#allocation4], 0
    // Predicated region
    $region2: #{tpu_custom_call.1} parent=1 // pred_check
      _
    $region3: #{tpu_custom_call.1} parent=1 // pred_check_branch
      %11 = sbr.rel (0) target = $region5
    $region4: #{tpu_custom_call.1} parent=1 // pred_region
      %s13 = ssub.s32 256, 256
      %14 = vsyncadd [#allocation3], %s13
      %s16 = sshll.u32 [#allocation2], 4
      %s17 = int_to_ptr.vmem [resolvable:$true] %s16
      %19 = dma.hbm_to_vmem [thread:$0]  %s0, 256, %s17, [#allocation3]
    $region5: #{tpu_custom_call.1} parent=1 // pred_fallthru
      _
    // Predicated region
    $region6: #{tpu_custom_call.1} parent=1 // pred_check
      _
    $region7: #{tpu_custom_call.1} parent=1 // pred_check_branch
      %21 = sbr.rel (0) target = $region9
    $region8: #{tpu_custom_call.1} parent=1 // pred_region
      %s23 = ssub.s32 4096, 4096
      %24 = vsyncadd [#allocation6], %s23
      %s25 = sshll.u32 [#allocation5], 4
      %s26 = int_to_ptr.vmem [resolvable:$true] %s25
      %31 = dma.hbm_to_vmem [thread:$0]  %s1, 4096, %s26, [#allocation6], 128, 128, 8
    $region9: #{tpu_custom_call.1} parent=1 // pred_fallthru
      _
    // Predicated region
    $region10: #{tpu_custom_call.1} parent=1 // pred_check
      _
    $region11: #{tpu_custom_call.1} parent=1 // pred_check_branch
      %33 = sbr.rel (0) target = $region13
    $region12: #{tpu_custom_call.1} parent=1 // pred_region
      %34 = dma.done [#allocation3], 256
    $region13: #{tpu_custom_call.1} parent=1 // pred_fallthru
      _
    // Predicated region
    $region14: #{tpu_custom_call.1} parent=1 // pred_check
      _
    $region15: #{tpu_custom_call.1} parent=1 // pred_check_branch
      %36 = sbr.rel (0) target = $region17
    $region16: #{tpu_custom_call.1} parent=1 // pred_region
      %37 = dma.done [#allocation6], 4096
    $region17: #{tpu_custom_call.1} parent=1 // pred_fallthru
      _
    %v38 = vld [vmem:[#allocation2] sm:$0xff]
    %v39 = vld [vmem:[#allocation2 + $0x8] sm:$0xff]
    %v40 = vld [vmem:[#allocation5] sm:$0xff]
    %v41 = vld [vmem:[#allocation5 + $0x8] sm:$0xff]
    %v42 = vld [vmem:[#allocation5 + $0x10] sm:$0xff]
    %v43 = vld [vmem:[#allocation5 + $0x18] sm:$0xff]
    %v44 = vld [vmem:[#allocation5 + $0x20] sm:$0xff]
    %v45 = vld [vmem:[#allocation5 + $0x28] sm:$0xff]
    %v46 = vld [vmem:[#allocation5 + $0x30] sm:$0xff]
    %v47 = vld [vmem:[#allocation5 + $0x38] sm:$0xff]
    %v48 = vld [vmem:[#allocation5 + $0x40] sm:$0xff]
    %v49 = vld [vmem:[#allocation5 + $0x48] sm:$0xff]
    %v50 = vld [vmem:[#allocation5 + $0x50] sm:$0xff]
    %v51 = vld [vmem:[#allocation5 + $0x58] sm:$0xff]
    %v52 = vld [vmem:[#allocation5 + $0x60] sm:$0xff]
    %v53 = vld [vmem:[#allocation5 + $0x68] sm:$0xff]
    %v54 = vld [vmem:[#allocation5 + $0x70] sm:$0xff]
    %v55 = vld [vmem:[#allocation5 + $0x78] sm:$0xff]
    %v56 = vld [vmem:[#allocation5 + $0x80] sm:$0xff]
    %v57 = vld [vmem:[#allocation5 + $0x88] sm:$0xff]
    %v58 = vld [vmem:[#allocation5 + $0x90] sm:$0xff]
    %v59 = vld [vmem:[#allocation5 + $0x98] sm:$0xff]
    %v60 = vld [vmem:[#allocation5 + $0xa0] sm:$0xff]
    %v61 = vld [vmem:[#allocation5 + $0xa8] sm:$0xff]
    %v62 = vld [vmem:[#allocation5 + $0xb0] sm:$0xff]
    %v63 = vld [vmem:[#allocation5 + $0xb8] sm:$0xff]
    %v64 = vld [vmem:[#allocation5 + $0xc0] sm:$0xff]
    %v65 = vld [vmem:[#allocation5 + $0xc8] sm:$0xff]
    %v66 = vld [vmem:[#allocation5 + $0xd0] sm:$0xff]
    %v67 = vld [vmem:[#allocation5 + $0xd8] sm:$0xff]
    %v68 = vld [vmem:[#allocation5 + $0xe0] sm:$0xff]
    %v69 = vld [vmem:[#allocation5 + $0xe8] sm:$0xff]
    %v70 = vld [vmem:[#allocation5 + $0xf0] sm:$0xff]
    %v71 = vld [vmem:[#allocation5 + $0xf8] sm:$0xff]
    %72 = vmatprep.subr.mxu0 0.0
    %73 = vmatpush1.msra.mxu0 %v55
    %74 = vmatprep.subr.mxu0 0.0
    %75 = vmatpush1.msra.mxu0 %v54
    %76 = vmatprep.subr.mxu0 0.0
    %77 = vmatpush1.msra.mxu0 %v53
    %78 = vmatprep.subr.mxu0 0.0
    %79 = vmatpush1.msra.mxu0 %v52
    %80 = vmatprep.subr.mxu0 0.0
    %81 = vmatpush1.msra.mxu0 %v51
    %82 = vmatprep.subr.mxu0 0.0
    %83 = vmatpush1.msra.mxu0 %v50
    %84 = vmatprep.subr.mxu0 0.0
    %85 = vmatpush1.msra.mxu0 %v49
    %86 = vmatprep.subr.mxu0 0.0
    %87 = vmatpush1.msra.mxu0 %v48
    %88 = vmatprep.subr.mxu0 0.0
    %89 = vmatpush1.msra.mxu0 %v47
    %90 = vmatprep.subr.mxu0 0.0
    %91 = vmatpush1.msra.mxu0 %v46
    %92 = vmatprep.subr.mxu0 0.0
    %93 = vmatpush1.msra.mxu0 %v45
    %94 = vmatprep.subr.mxu0 0.0
    %95 = vmatpush1.msra.mxu0 %v44
    %96 = vmatprep.subr.mxu0 0.0
    %97 = vmatpush1.msra.mxu0 %v43
    %98 = vmatprep.subr.mxu0 0.0
    %99 = vmatpush1.msra.mxu0 %v42
    %100 = vmatprep.subr.mxu0 0.0
    %101 = vmatpush1.msra.mxu0 %v41
    %102 = vmatprep.subr.mxu0 0.0
    %103 = vmatpush1.msra.mxu0 %v40
    %104 = vmatprep.subr.mxu0 0.0
    %105 = vmatpush2.msra.mxu0 %v71
    %106 = vmatprep.subr.mxu0 0.0
    %107 = vmatpush2.msra.mxu0 %v70
    %108 = vmatprep.subr.mxu0 0.0
    %109 = vmatpush2.msra.mxu0 %v69
    %110 = vmatprep.subr.mxu0 0.0
    %111 = vmatpush2.msra.mxu0 %v68
    %112 = vmatprep.subr.mxu0 0.0
    %113 = vmatpush2.msra.mxu0 %v67
    %114 = vmatprep.subr.mxu0 0.0
    %115 = vmatpush2.msra.mxu0 %v66
    %116 = vmatprep.subr.mxu0 0.0
    %117 = vmatpush2.msra.mxu0 %v65
    %118 = vmatprep.subr.mxu0 0.0
    %119 = vmatpush2.msra.mxu0 %v64
    %120 = vmatprep.subr.mxu0 0.0
    %121 = vmatpush2.msra.mxu0 %v63
    %122 = vmatprep.subr.mxu0 0.0
    %123 = vmatpush2.msra.mxu0 %v62
    %124 = vmatprep.subr.mxu0 0.0
    %125 = vmatpush2.msra.mxu0 %v61
    %126 = vmatprep.subr.mxu0 0.0
    %127 = vmatpush2.msra.mxu0 %v60
    %128 = vmatprep.subr.mxu0 0.0
    %129 = vmatpush2.msra.mxu0 %v59
    %130 = vmatprep.subr.mxu0 0.0
    %131 = vmatpush2.msra.mxu0 %v58
    %132 = vmatprep.subr.mxu0 0.0
    %133 = vmatpush2.msra.mxu0 %v57
    %134 = vmatprep.subr.mxu0 0.0
    %135 = vmatpush2.msra.mxu0 %v56
    %136 = vmatprep.mubr.f32.mxu0 %v39
    %137 = vmatmul.mubr.f32.gmra.mxu0 %v38
    %v138 = vpop.f32.mrf.mxu0
    %v139 = vadd.f32 0.0, %v138
    %v140 = vpop.f32.mrf.mxu0
    %141 = vdwg.mxu0
    %142 = vst [vmem:[#allocation7] sm:$0xff] %v139
    // Predicated region
    $region18: #{tpu_custom_call.1} parent=1 // pred_check
      _
    $region19: #{tpu_custom_call.1} parent=1 // pred_check_branch
      %144 = sbr.rel (0) target = $region21
    $region20: #{tpu_custom_call.1} parent=1 // pred_region
      %s146 = ssub.s32 128, 128
      %147 = vsyncadd [#allocation4], %s146
      %s149 = sshll.u32 [#allocation7], 4
      %s150 = int_to_ptr.vmem [resolvable:$true] %s149
      %152 = dma.vmem_to_hbm [thread:$0]  %s150, 128, %s2, [#allocation4]
    $region21: #{tpu_custom_call.1} parent=1 // pred_fallthru
      _
    // Predicated region
    $region22: #{tpu_custom_call.1} parent=1 // pred_check
      _
    $region23: #{tpu_custom_call.1} parent=1 // pred_check_branch
      %154 = sbr.rel (0) target = $region25
    $region24: #{tpu_custom_call.1} parent=1 // pred_region
      %155 = dma.done [#allocation4], 128
    $region25: #{tpu_custom_call.1} parent=1 // pred_fallthru
      _
    %156 = vsyncpa [#allocation3], 1
    %157 = vsyncpa [#allocation6], 1
    %158 = vsyncpa [#allocation4], 1

</llo_original>
